<compile_context>
chip_gen: v7x
topology: tpu7x:2x2x1
jax: 0.10.0
libtpu: 0.0.40
codegen_flags: <defaults>
</compile_context>

<pallas_src>
import jax
import jax.numpy as jnp
from jax.experimental import pallas as pl
from jax.experimental.pallas import tpu as pltpu


def _vmem_spec():
    return pl.BlockSpec(memory_space=pltpu.MemorySpace.VMEM)


# ---------------------------------------------------------------------------
# Fused encoder kernel (all layers + pooling + concat in one kernel)
# ---------------------------------------------------------------------------
def make_fused_encoder_kernel(num_layers, hidden):
    """Build the fused GINEncoder kernel for a static number of layers.

    Ref layout:
      inputs : a_hat (bf16), pool (bf16), x (bf16),
               then per layer (w1 bf16, b1 f32, w2 bf16, b2 f32, gamma f32, beta f32)
      outputs: graph_out [G, H*L] f32, node_out [N, H*L] f32
    """

    def kernel(*refs):
        a_ref, p_ref, x_ref = refs[0], refs[1], refs[2]
        w_refs = refs[3:3 + 6 * num_layers]
        graph_ref = refs[3 + 6 * num_layers]
        node_ref = refs[4 + 6 * num_layers]

        a_bf = a_ref[...]            # bf16 A_hat = A + I (small ints -> exact)
        p_bf = p_ref[...]            # bf16 one-hot pooling matrix     (exact)
        h_bf = x_ref[...]            # bf16 activation carried layer -> layer
        inv_n = jnp.float32(1.0 / node_ref.shape[0])

        for l in range(num_layers):
            w1, b1, w2, b2, gamma, beta = w_refs[6 * l: 6 * (l + 1)]

            # GINConv aggregation (eps = 0):
            #   (1+eps)*x_i + sum_{j in N(i)} x_j  ==  A_hat @ h
            # MXU fast path: bf16 operands, f32 accumulation.
            agg = jnp.dot(a_bf, h_bf, preferred_element_type=jnp.float32)

            # MLP = Linear -> ReLU -> Linear (weights already bf16).
            z = jnp.dot(agg.astype(jnp.bfloat16), w1[...],
                        preferred_element_type=jnp.float32) + b1[...]
            z = jnp.maximum(z, 0.0)
            z = jnp.dot(z.astype(jnp.bfloat16), w2[...],
                        preferred_element_type=jnp.float32) + b2[...]

            # F.relu(conv(x, edge_index))
            z = jnp.maximum(z, 0.0)

            # BatchNorm1d (training mode: batch stats, biased var, eps=1e-5).
            # One-pass statistics: sum & sum-of-squares; z is ReLU-bounded so
            # E[z^2]-mean^2 is safe.  gamma folded into inv_std (single FMA).
            col_sum = jnp.sum(z, axis=0, keepdims=True)
            col_sumsq = jnp.sum(z * z, axis=0, keepdims=True)
            mean = col_sum * inv_n
            var = jnp.maximum(col_sumsq * inv_n - mean * mean, 0.0)
            scale = gamma[...] * jax.lax.rsqrt(var + 1e-5)
            shift = beta[...] - mean * scale
            z = z * scale + shift

            # Write this layer's output straight into the node slab
            # (static column slice -> no duplicate slab, no trailing concat).
            node_ref[:, l * hidden:(l + 1) * hidden] = z

            # Carry to the next layer without touching HBM; cast once and
            # reuse for the next A_hat @ h.
            h_bf = z.astype(jnp.bfloat16)

        # global_add_pool for ALL layers fused as ONE matmul over the slab.
        graph_ref[...] = jnp.dot(p_bf, node_ref[...].astype(jnp.bfloat16),
                                 preferred_element_type=jnp.float32)

    return kernel


# ---------------------------------------------------------------------------
# Wrapper
# ---------------------------------------------------------------------------
def _resident_vmem_bytes(n, g, f, hidden, num_layers):
    """Rough VMEM-resident footprint of the fused kernel (bytes)."""
    out_dim = hidden * num_layers
    b = n * n * 2 + g * n * 2 + n * f * 2            # a_hat, pool, x   (bf16)
    in_dim = f
    for _ in range(num_layers):
        b += in_dim * hidden * 2 + hidden * hidden * 2   # w1, w2        (bf16)
        b += 4 * hidden * 4                              # b1,b2,gamma,beta (f32)
        in_dim = hidden
    b += (n + g) * out_dim * 4                       # outputs           (f32)
    b += 4 * n * max(f, hidden) * 4                  # live f32 working activations
    return b


def gca_forward(params, x, a_hat, pool_mat):
    """Equivalent of GCA.forward: returns (graph_embedding, node_embedding)."""
    num_layers = len(params)
    n, f = x.shape
    g = pool_mat.shape[0]
    hidden = params[0][2].shape[1]          # w2 output dim
    out_dim = hidden * num_layers

    # Weights: matmul operands in bf16 (halves DMA bytes / VMEM), per-feature
    # bias / BN affine params stay f32 (used only by VPU elementwise math).
    flat_params = []
    for (w1, b1, w2, b2, gamma, beta) in params:
        flat_params += [w1.astype(jnp.bfloat16), b1.astype(jnp.float32),
                        w2.astype(jnp.bfloat16), b2.astype(jnp.float32),
                        gamma.astype(jnp.float32), beta.astype(jnp.float32)]
    num_in = 3 + len(flat_params)

    # Scoped-VMEM limit sized to the actual resident footprint (+ headroom);
    # the 16/32 MiB defaults are far below physical VMEM.
    resident = _resident_vmem_bytes(n, g, f, hidden, num_layers)
    vmem_limit = min(max(int(resident * 1.5) + (8 << 20), 32 << 20), 100 << 20)
    # TODO(synk): if `resident` exceeds ~56 MiB (v7x) / ~100 MiB (v5e/v6e),
    # switch to a row-tiled grid with cross-tile BN reduction instead of the
    # fully VMEM-resident formulation used here.

    # Advisory cost estimate for the XLA scheduler.
    flops, in_dim = 0, f
    for _ in range(num_layers):
        flops += 2 * n * n * in_dim          # A_hat @ h
        flops += 2 * n * in_dim * hidden     # @ w1
        flops += 2 * n * hidden * hidden     # @ w2
        in_dim = hidden
    flops += 2 * g * n * out_dim             # single fused pooling matmul
    bytes_accessed = (a_hat.size * 2 + pool_mat.size * 2 + x.size * 2
                      + sum(int(p.size) * p.dtype.itemsize for p in flat_params)
                      + (n + g) * out_dim * 4)
    cost = pl.CostEstimate(flops=int(flops),
                           transcendentals=int(num_layers * hidden),
                           bytes_accessed=int(bytes_accessed))

    graph, node = pl.pallas_call(
        make_fused_encoder_kernel(num_layers, hidden),
        out_shape=(jax.ShapeDtypeStruct((g, out_dim), jnp.float32),
                   jax.ShapeDtypeStruct((n, out_dim), jnp.float32)),
        in_specs=[_vmem_spec()] * num_in,
        out_specs=(_vmem_spec(), _vmem_spec()),
        compiler_params=pltpu.CompilerParams(vmem_limit_bytes=vmem_limit),
        cost_estimate=cost,
    )(a_hat.astype(jnp.bfloat16),            # exact: entries are small ints
      pool_mat.astype(jnp.bfloat16),         # exact: 0/1 one-hot
      x.astype(jnp.bfloat16),
      *flat_params)
    return graph, node


# ---------------------------------------------------------------------------
# Deterministic parameter init (GINEncoder: per layer Linear/Linear/BN)
# ---------------------------------------------------------------------------
def init_params(key, num_features, hidden_dim, num_layers):
    params = []
    in_dim = num_features
    for _ in range(num_layers):
        key, k1, k2 = jax.random.split(key, 3)
        w1 = jax.random.normal(k1, (in_dim, hidden_dim), jnp.float32) * 0.1
        b1 = jnp.zeros((1, hidden_dim), jnp.float32)
        w2 = jax.random.normal(k2, (hidden_dim, hidden_dim), jnp.float32) * 0.1
        b2 = jnp.zeros((1, hidden_dim), jnp.float32)
        gamma = jnp.ones((1, hidden_dim), jnp.float32)   # BN weight
        beta = jnp.zeros((1, hidden_dim), jnp.float32)   # BN bias
        params.append((w1, b1, w2, b2, gamma, beta))
        in_dim = hidden_dim
    return params


# ---------------------------------------------------------------------------
# Graph-structure glue (dense adjacency + pooling matrix)
# ---------------------------------------------------------------------------
def build_a_hat(edge_index, num_nodes):
    src, dst = edge_index[0], edge_index[1]
    a = jnp.zeros((num_nodes, num_nodes), jnp.float32).at[dst, src].add(1.0)
    return a + jnp.eye(num_nodes, dtype=jnp.float32)   # (1+eps)*x with eps=0


def build_pool_mat(batch, num_graphs):
    return (batch[None, :] == jnp.arange(num_graphs)[:, None]).astype(jnp.float32)


# ---------------------------------------------------------------------------
if __name__ == "__main__":
    num_nodes = 16          # total nodes across the batch of graphs
    num_features = 8        # dataset_num_features
    hidden_dim = 32         # args.hidden_dim
    num_layers = 3          # args.layer
    num_graphs = 2
    num_edges = 32

    key = jax.random.PRNGKey(0)
    k_x, k_e, k_p = jax.random.split(key, 3)

    # Node features [N, F]
    x = jax.random.normal(k_x, (num_nodes, num_features), jnp.float32)

    # Random directed edge_index [2, E] and graph-membership vector `batch` [N]
    edge_index = jax.random.randint(k_e, (2, num_edges), 0, num_nodes,
                                    dtype=jnp.int32)
    batch = jnp.concatenate([jnp.zeros((num_nodes // 2,), jnp.int32),
                             jnp.ones((num_nodes - num_nodes // 2,), jnp.int32)])

    a_hat = build_a_hat(edge_index, num_nodes)
    pool_mat = build_pool_mat(batch, num_graphs)

    params = init_params(k_p, num_features, hidden_dim, num_layers)

    fwd = jax.jit(gca_forward)
    graph_emb, node_emb = fwd(params, x, a_hat, pool_mat)
    graph_emb = jax.block_until_ready(graph_emb)
    node_emb = jax.block_until_ready(node_emb)

    assert graph_emb.shape == (num_graphs, hidden_dim * num_layers)
    assert node_emb.shape == (num_nodes, hidden_dim * num_layers)
    assert bool(jnp.all(jnp.isfinite(graph_emb))) and bool(jnp.all(jnp.isfinite(node_emb)))
    print("KERNEL_OK")
</pallas_src>

<mosaic_0001>
module attributes {stable_mosaic.version = 11 : i64} {
  func.func @kernel(%arg0: memref<16x16xbf16, #tpu.memory_space<vmem>>, %arg1: memref<2x16xbf16, #tpu.memory_space<vmem>>, %arg2: memref<16x8xbf16, #tpu.memory_space<vmem>>, %arg3: memref<8x32xbf16, #tpu.memory_space<vmem>>, %arg4: memref<1x32xf32, #tpu.memory_space<vmem>>, %arg5: memref<32x32xbf16, #tpu.memory_space<vmem>>, %arg6: memref<1x32xf32, #tpu.memory_space<vmem>>, %arg7: memref<1x32xf32, #tpu.memory_space<vmem>>, %arg8: memref<1x32xf32, #tpu.memory_space<vmem>>, %arg9: memref<32x32xbf16, #tpu.memory_space<vmem>>, %arg10: memref<1x32xf32, #tpu.memory_space<vmem>>, %arg11: memref<32x32xbf16, #tpu.memory_space<vmem>>, %arg12: memref<1x32xf32, #tpu.memory_space<vmem>>, %arg13: memref<1x32xf32, #tpu.memory_space<vmem>>, %arg14: memref<1x32xf32, #tpu.memory_space<vmem>>, %arg15: memref<32x32xbf16, #tpu.memory_space<vmem>>, %arg16: memref<1x32xf32, #tpu.memory_space<vmem>>, %arg17: memref<32x32xbf16, #tpu.memory_space<vmem>>, %arg18: memref<1x32xf32, #tpu.memory_space<vmem>>, %arg19: memref<1x32xf32, #tpu.memory_space<vmem>>, %arg20: memref<1x32xf32, #tpu.memory_space<vmem>>, %arg21: memref<2x96xf32, #tpu.memory_space<vmem>>, %arg22: memref<16x96xf32, #tpu.memory_space<vmem>>) attributes {dimension_semantics = [], scalar_prefetch = 0 : i64, scratch_operands = 0 : i64, tpu.core_type = #tpu.core_type<tc>} {
    %c0 = arith.constant 0 : index
    %c0_0 = arith.constant 0 : index
    %0 = vector.load %arg0[%c0, %c0_0] : memref<16x16xbf16, #tpu.memory_space<vmem>>, vector<16x16xbf16>
    %c0_1 = arith.constant 0 : index
    %c0_2 = arith.constant 0 : index
    %1 = vector.load %arg1[%c0_1, %c0_2] : memref<2x16xbf16, #tpu.memory_space<vmem>>, vector<2x16xbf16>
    %c0_3 = arith.constant 0 : index
    %c0_4 = arith.constant 0 : index
    %2 = vector.load %arg2[%c0_3, %c0_4] : memref<16x8xbf16, #tpu.memory_space<vmem>>, vector<16x8xbf16>
    %cst = arith.constant dense<0.000000e+00> : vector<16x8xf32>
    %3 = tpu.matmul %0, %2, %cst {dimension_numbers = #tpu.dot_dimension_numbers<[1], [0], [0], [1], [0, 0, 1, 1], [], []>} : vector<16x16xbf16>, vector<16x8xbf16>, vector<16x8xf32> -> vector<16x8xf32>
    %4 = arith.truncf %3 : vector<16x8xf32> to vector<16x8xbf16>
    %c0_5 = arith.constant 0 : index
    %c0_6 = arith.constant 0 : index
    %5 = vector.load %arg3[%c0_5, %c0_6] : memref<8x32xbf16, #tpu.memory_space<vmem>>, vector<8x32xbf16>
    %cst_7 = arith.constant dense<0.000000e+00> : vector<16x32xf32>
    %6 = tpu.matmul %4, %5, %cst_7 {dimension_numbers = #tpu.dot_dimension_numbers<[1], [0], [0], [1], [0, 0, 1, 1], [], []>} : vector<16x8xbf16>, vector<8x32xbf16>, vector<16x32xf32> -> vector<16x32xf32>
    %c0_8 = arith.constant 0 : index
    %c0_9 = arith.constant 0 : index
    %7 = vector.load %arg4[%c0_8, %c0_9] : memref<1x32xf32, #tpu.memory_space<vmem>>, vector<1x32xf32>
    %8 = vector.broadcast %7 : vector<1x32xf32> to vector<16x32xf32>
    %9 = arith.addf %6, %8 : vector<16x32xf32>
    %cst_10 = arith.constant 0.000000e+00 : f32
    %10 = vector.broadcast %cst_10 : f32 to vector<16x32xf32>
    %11 = arith.maximumf %9, %10 : vector<16x32xf32>
    %12 = arith.truncf %11 : vector<16x32xf32> to vector<16x32xbf16>
    %c0_11 = arith.constant 0 : index
    %c0_12 = arith.constant 0 : index
    %13 = vector.load %arg5[%c0_11, %c0_12] : memref<32x32xbf16, #tpu.memory_space<vmem>>, vector<32x32xbf16>
    %cst_13 = arith.constant dense<0.000000e+00> : vector<16x32xf32>
    %14 = tpu.matmul %12, %13, %cst_13 {dimension_numbers = #tpu.dot_dimension_numbers<[1], [0], [0], [1], [0, 0, 1, 1], [], []>} : vector<16x32xbf16>, vector<32x32xbf16>, vector<16x32xf32> -> vector<16x32xf32>
    %c0_14 = arith.constant 0 : index
    %c0_15 = arith.constant 0 : index
    %15 = vector.load %arg6[%c0_14, %c0_15] : memref<1x32xf32, #tpu.memory_space<vmem>>, vector<1x32xf32>
    %16 = vector.broadcast %15 : vector<1x32xf32> to vector<16x32xf32>
    %17 = arith.addf %14, %16 : vector<16x32xf32>
    %cst_16 = arith.constant 0.000000e+00 : f32
    %18 = vector.broadcast %cst_16 : f32 to vector<16x32xf32>
    %19 = arith.maximumf %17, %18 : vector<16x32xf32>
    %cst_17 = arith.constant dense<0.000000e+00> : vector<32xf32>
    %20 = vector.multi_reduction <add>, %19, %cst_17 [0] : vector<16x32xf32> to vector<32xf32>
    %21 = vector.shape_cast %20 : vector<32xf32> to vector<1x32xf32>
    %22 = arith.mulf %19, %19 : vector<16x32xf32>
    %cst_18 = arith.constant dense<0.000000e+00> : vector<32xf32>
    %23 = vector.multi_reduction <add>, %22, %cst_18 [0] : vector<16x32xf32> to vector<32xf32>
    %24 = vector.shape_cast %23 : vector<32xf32> to vector<1x32xf32>
    %cst_19 = arith.constant 6.250000e-02 : f32
    %25 = vector.broadcast %cst_19 : f32 to vector<1x32xf32>
    %26 = arith.mulf %21, %25 : vector<1x32xf32>
    %cst_20 = arith.constant 6.250000e-02 : f32
    %27 = vector.broadcast %cst_20 : f32 to vector<1x32xf32>
    %28 = arith.mulf %24, %27 : vector<1x32xf32>
    %29 = arith.mulf %26, %26 : vector<1x32xf32>
    %30 = arith.subf %28, %29 : vector<1x32xf32>
    %cst_21 = arith.constant 0.000000e+00 : f32
    %31 = vector.broadcast %cst_21 : f32 to vector<1x32xf32>
    %32 = arith.maximumf %30, %31 : vector<1x32xf32>
    %c0_22 = arith.constant 0 : index
    %c0_23 = arith.constant 0 : index
    %33 = vector.load %arg7[%c0_22, %c0_23] : memref<1x32xf32, #tpu.memory_space<vmem>>, vector<1x32xf32>
    %cst_24 = arith.constant 9.99999974E-6 : f32
    %34 = vector.broadcast %cst_24 : f32 to vector<1x32xf32>
    %35 = arith.addf %32, %34 : vector<1x32xf32>
    %36 = math.rsqrt %35 : vector<1x32xf32>
    %37 = arith.mulf %33, %36 : vector<1x32xf32>
    %c0_25 = arith.constant 0 : index
    %c0_26 = arith.constant 0 : index
    %38 = vector.load %arg8[%c0_25, %c0_26] : memref<1x32xf32, #tpu.memory_space<vmem>>, vector<1x32xf32>
    %39 = arith.mulf %26, %37 : vector<1x32xf32>
    %40 = arith.subf %38, %39 : vector<1x32xf32>
    %41 = vector.broadcast %37 : vector<1x32xf32> to vector<16x32xf32>
    %42 = arith.mulf %19, %41 : vector<16x32xf32>
    %43 = vector.broadcast %40 : vector<1x32xf32> to vector<16x32xf32>
    %44 = arith.addf %42, %43 : vector<16x32xf32>
    %c0_27 = arith.constant 0 : index
    %c0_28 = arith.constant 0 : index
    %45 = vector.load %arg22[%c0_27, %c0_28] : memref<16x96xf32, #tpu.memory_space<vmem>>, vector<16x32xf32>
    tpu.vector_store %arg22[%c0_27, %c0_28], %44 {strides = array<i32>} : memref<16x96xf32, #tpu.memory_space<vmem>>, vector<16x32xf32>,
    %46 = arith.truncf %44 : vector<16x32xf32> to vector<16x32xbf16>
    %cst_29 = arith.constant dense<0.000000e+00> : vector<16x32xf32>
    %47 = tpu.matmul %0, %46, %cst_29 {dimension_numbers = #tpu.dot_dimension_numbers<[1], [0], [0], [1], [0, 0, 1, 1], [], []>} : vector<16x16xbf16>, vector<16x32xbf16>, vector<16x32xf32> -> vector<16x32xf32>
    %48 = arith.truncf %47 : vector<16x32xf32> to vector<16x32xbf16>
    %c0_30 = arith.constant 0 : index
    %c0_31 = arith.constant 0 : index
    %49 = vector.load %arg9[%c0_30, %c0_31] : memref<32x32xbf16, #tpu.memory_space<vmem>>, vector<32x32xbf16>
    %cst_32 = arith.constant dense<0.000000e+00> : vector<16x32xf32>
    %50 = tpu.matmul %48, %49, %cst_32 {dimension_numbers = #tpu.dot_dimension_numbers<[1], [0], [0], [1], [0, 0, 1, 1], [], []>} : vector<16x32xbf16>, vector<32x32xbf16>, vector<16x32xf32> -> vector<16x32xf32>
    %c0_33 = arith.constant 0 : index
    %c0_34 = arith.constant 0 : index
    %51 = vector.load %arg10[%c0_33, %c0_34] : memref<1x32xf32, #tpu.memory_space<vmem>>, vector<1x32xf32>
    %52 = vector.broadcast %51 : vector<1x32xf32> to vector<16x32xf32>
    %53 = arith.addf %50, %52 : vector<16x32xf32>
    %cst_35 = arith.constant 0.000000e+00 : f32
    %54 = vector.broadcast %cst_35 : f32 to vector<16x32xf32>
    %55 = arith.maximumf %53, %54 : vector<16x32xf32>
    %56 = arith.truncf %55 : vector<16x32xf32> to vector<16x32xbf16>
    %c0_36 = arith.constant 0 : index
    %c0_37 = arith.constant 0 : index
    %57 = vector.load %arg11[%c0_36, %c0_37] : memref<32x32xbf16, #tpu.memory_space<vmem>>, vector<32x32xbf16>
    %cst_38 = arith.constant dense<0.000000e+00> : vector<16x32xf32>
    %58 = tpu.matmul %56, %57, %cst_38 {dimension_numbers = #tpu.dot_dimension_numbers<[1], [0], [0], [1], [0, 0, 1, 1], [], []>} : vector<16x32xbf16>, vector<32x32xbf16>, vector<16x32xf32> -> vector<16x32xf32>
    %c0_39 = arith.constant 0 : index
    %c0_40 = arith.constant 0 : index
    %59 = vector.load %arg12[%c0_39, %c0_40] : memref<1x32xf32, #tpu.memory_space<vmem>>, vector<1x32xf32>
    %60 = vector.broadcast %59 : vector<1x32xf32> to vector<16x32xf32>
    %61 = arith.addf %58, %60 : vector<16x32xf32>
    %cst_41 = arith.constant 0.000000e+00 : f32
    %62 = vector.broadcast %cst_41 : f32 to vector<16x32xf32>
    %63 = arith.maximumf %61, %62 : vector<16x32xf32>
    %cst_42 = arith.constant dense<0.000000e+00> : vector<32xf32>
    %64 = vector.multi_reduction <add>, %63, %cst_42 [0] : vector<16x32xf32> to vector<32xf32>
    %65 = vector.shape_cast %64 : vector<32xf32> to vector<1x32xf32>
    %66 = arith.mulf %63, %63 : vector<16x32xf32>
    %cst_43 = arith.constant dense<0.000000e+00> : vector<32xf32>
    %67 = vector.multi_reduction <add>, %66, %cst_43 [0] : vector<16x32xf32> to vector<32xf32>
    %68 = vector.shape_cast %67 : vector<32xf32> to vector<1x32xf32>
    %cst_44 = arith.constant 6.250000e-02 : f32
    %69 = vector.broadcast %cst_44 : f32 to vector<1x32xf32>
    %70 = arith.mulf %65, %69 : vector<1x32xf32>
    %cst_45 = arith.constant 6.250000e-02 : f32
    %71 = vector.broadcast %cst_45 : f32 to vector<1x32xf32>
    %72 = arith.mulf %68, %71 : vector<1x32xf32>
    %73 = arith.mulf %70, %70 : vector<1x32xf32>
    %74 = arith.subf %72, %73 : vector<1x32xf32>
    %cst_46 = arith.constant 0.000000e+00 : f32
    %75 = vector.broadcast %cst_46 : f32 to vector<1x32xf32>
    %76 = arith.maximumf %74, %75 : vector<1x32xf32>
    %c0_47 = arith.constant 0 : index
    %c0_48 = arith.constant 0 : index
    %77 = vector.load %arg13[%c0_47, %c0_48] : memref<1x32xf32, #tpu.memory_space<vmem>>, vector<1x32xf32>
    %cst_49 = arith.constant 9.99999974E-6 : f32
    %78 = vector.broadcast %cst_49 : f32 to vector<1x32xf32>
    %79 = arith.addf %76, %78 : vector<1x32xf32>
    %80 = math.rsqrt %79 : vector<1x32xf32>
    %81 = arith.mulf %77, %80 : vector<1x32xf32>
    %c0_50 = arith.constant 0 : index
    %c0_51 = arith.constant 0 : index
    %82 = vector.load %arg14[%c0_50, %c0_51] : memref<1x32xf32, #tpu.memory_space<vmem>>, vector<1x32xf32>
    %83 = arith.mulf %70, %81 : vector<1x32xf32>
    %84 = arith.subf %82, %83 : vector<1x32xf32>
    %85 = vector.broadcast %81 : vector<1x32xf32> to vector<16x32xf32>
    %86 = arith.mulf %63, %85 : vector<16x32xf32>
    %87 = vector.broadcast %84 : vector<1x32xf32> to vector<16x32xf32>
    %88 = arith.addf %86, %87 : vector<16x32xf32>
    %c0_52 = arith.constant 0 : index
    %c32 = arith.constant 32 : index
    %89 = vector.load %arg22[%c0_52, %c32] : memref<16x96xf32, #tpu.memory_space<vmem>>, vector<16x32xf32>
    tpu.vector_store %arg22[%c0_52, %c32], %88 {strides = array<i32>} : memref<16x96xf32, #tpu.memory_space<vmem>>, vector<16x32xf32>,
    %90 = arith.truncf %88 : vector<16x32xf32> to vector<16x32xbf16>
    %cst_53 = arith.constant dense<0.000000e+00> : vector<16x32xf32>
    %91 = tpu.matmul %0, %90, %cst_53 {dimension_numbers = #tpu.dot_dimension_numbers<[1], [0], [0], [1], [0, 0, 1, 1], [], []>} : vector<16x16xbf16>, vector<16x32xbf16>, vector<16x32xf32> -> vector<16x32xf32>
    %92 = arith.truncf %91 : vector<16x32xf32> to vector<16x32xbf16>
    %c0_54 = arith.constant 0 : index
    %c0_55 = arith.constant 0 : index
    %93 = vector.load %arg15[%c0_54, %c0_55] : memref<32x32xbf16, #tpu.memory_space<vmem>>, vector<32x32xbf16>
    %cst_56 = arith.constant dense<0.000000e+00> : vector<16x32xf32>
    %94 = tpu.matmul %92, %93, %cst_56 {dimension_numbers = #tpu.dot_dimension_numbers<[1], [0], [0], [1], [0, 0, 1, 1], [], []>} : vector<16x32xbf16>, vector<32x32xbf16>, vector<16x32xf32> -> vector<16x32xf32>
    %c0_57 = arith.constant 0 : index
    %c0_58 = arith.constant 0 : index
    %95 = vector.load %arg16[%c0_57, %c0_58] : memref<1x32xf32, #tpu.memory_space<vmem>>, vector<1x32xf32>
    %96 = vector.broadcast %95 : vector<1x32xf32> to vector<16x32xf32>
    %97 = arith.addf %94, %96 : vector<16x32xf32>
    %cst_59 = arith.constant 0.000000e+00 : f32
    %98 = vector.broadcast %cst_59 : f32 to vector<16x32xf32>
    %99 = arith.maximumf %97, %98 : vector<16x32xf32>
    %100 = arith.truncf %99 : vector<16x32xf32> to vector<16x32xbf16>
    %c0_60 = arith.constant 0 : index
    %c0_61 = arith.constant 0 : index
    %101 = vector.load %arg17[%c0_60, %c0_61] : memref<32x32xbf16, #tpu.memory_space<vmem>>, vector<32x32xbf16>
    %cst_62 = arith.constant dense<0.000000e+00> : vector<16x32xf32>
    %102 = tpu.matmul %100, %101, %cst_62 {dimension_numbers = #tpu.dot_dimension_numbers<[1], [0], [0], [1], [0, 0, 1, 1], [], []>} : vector<16x32xbf16>, vector<32x32xbf16>, vector<16x32xf32> -> vector<16x32xf32>
    %c0_63 = arith.constant 0 : index
    %c0_64 = arith.constant 0 : index
    %103 = vector.load %arg18[%c0_63, %c0_64] : memref<1x32xf32, #tpu.memory_space<vmem>>, vector<1x32xf32>
    %104 = vector.broadcast %103 : vector<1x32xf32> to vector<16x32xf32>
    %105 = arith.addf %102, %104 : vector<16x32xf32>
    %cst_65 = arith.constant 0.000000e+00 : f32
    %106 = vector.broadcast %cst_65 : f32 to vector<16x32xf32>
    %107 = arith.maximumf %105, %106 : vector<16x32xf32>
    %cst_66 = arith.constant dense<0.000000e+00> : vector<32xf32>
    %108 = vector.multi_reduction <add>, %107, %cst_66 [0] : vector<16x32xf32> to vector<32xf32>
    %109 = vector.shape_cast %108 : vector<32xf32> to vector<1x32xf32>
    %110 = arith.mulf %107, %107 : vector<16x32xf32>
    %cst_67 = arith.constant dense<0.000000e+00> : vector<32xf32>
    %111 = vector.multi_reduction <add>, %110, %cst_67 [0] : vector<16x32xf32> to vector<32xf32>
    %112 = vector.shape_cast %111 : vector<32xf32> to vector<1x32xf32>
    %cst_68 = arith.constant 6.250000e-02 : f32
    %113 = vector.broadcast %cst_68 : f32 to vector<1x32xf32>
    %114 = arith.mulf %109, %113 : vector<1x32xf32>
    %cst_69 = arith.constant 6.250000e-02 : f32
    %115 = vector.broadcast %cst_69 : f32 to vector<1x32xf32>
    %116 = arith.mulf %112, %115 : vector<1x32xf32>
    %117 = arith.mulf %114, %114 : vector<1x32xf32>
    %118 = arith.subf %116, %117 : vector<1x32xf32>
    %cst_70 = arith.constant 0.000000e+00 : f32
    %119 = vector.broadcast %cst_70 : f32 to vector<1x32xf32>
    %120 = arith.maximumf %118, %119 : vector<1x32xf32>
    %c0_71 = arith.constant 0 : index
    %c0_72 = arith.constant 0 : index
    %121 = vector.load %arg19[%c0_71, %c0_72] : memref<1x32xf32, #tpu.memory_space<vmem>>, vector<1x32xf32>
    %cst_73 = arith.constant 9.99999974E-6 : f32
    %122 = vector.broadcast %cst_73 : f32 to vector<1x32xf32>
    %123 = arith.addf %120, %122 : vector<1x32xf32>
    %124 = math.rsqrt %123 : vector<1x32xf32>
    %125 = arith.mulf %121, %124 : vector<1x32xf32>
    %c0_74 = arith.constant 0 : index
    %c0_75 = arith.constant 0 : index
    %126 = vector.load %arg20[%c0_74, %c0_75] : memref<1x32xf32, #tpu.memory_space<vmem>>, vector<1x32xf32>
    %127 = arith.mulf %114, %125 : vector<1x32xf32>
    %128 = arith.subf %126, %127 : vector<1x32xf32>
    %129 = vector.broadcast %125 : vector<1x32xf32> to vector<16x32xf32>
    %130 = arith.mulf %107, %129 : vector<16x32xf32>
    %131 = vector.broadcast %128 : vector<1x32xf32> to vector<16x32xf32>
    %132 = arith.addf %130, %131 : vector<16x32xf32>
    %c0_76 = arith.constant 0 : index
    %c64 = arith.constant 64 : index
    %133 = vector.load %arg22[%c0_76, %c64] : memref<16x96xf32, #tpu.memory_space<vmem>>, vector<16x32xf32>
    tpu.vector_store %arg22[%c0_76, %c64], %132 {strides = array<i32>} : memref<16x96xf32, #tpu.memory_space<vmem>>, vector<16x32xf32>,
    %c0_77 = arith.constant 0 : index
    %c0_78 = arith.constant 0 : index
    %134 = vector.load %arg22[%c0_77, %c0_78] : memref<16x96xf32, #tpu.memory_space<vmem>>, vector<16x96xf32>
    %135 = arith.truncf %134 : vector<16x96xf32> to vector<16x96xbf16>
    %cst_79 = arith.constant dense<0.000000e+00> : vector<2x96xf32>
    %136 = tpu.matmul %1, %135, %cst_79 {dimension_numbers = #tpu.dot_dimension_numbers<[1], [0], [0], [1], [0, 0, 1, 1], [], []>} : vector<2x16xbf16>, vector<16x96xbf16>, vector<2x96xf32> -> vector<2x96xf32>
    %c0_80 = arith.constant 0 : index
    %c0_81 = arith.constant 0 : index
    %137 = vector.load %arg21[%c0_80, %c0_81] : memref<2x96xf32, #tpu.memory_space<vmem>>, vector<2x96xf32>
    tpu.vector_store %arg21[%c0_80, %c0_81], %136 {strides = array<i32>} : memref<2x96xf32, #tpu.memory_space<vmem>>, vector<2x96xf32>,
    return
  }
}

</mosaic_0001>

<llo_original>
// kernel: gca_forward.1
$region0: #{gca_forward.1}
  #allocation0 [shape = 'u32[]', space=smem, size = 0x4, offset = 0x4, fixed_abs, tag = 'smem constant byte address 0x4 - core index']
  #allocation1 [shape = 'u32[144,128]{1,0:T(1,128)}', space=vmem, size = 0x12000, scoped, tag = 'internal scratch']
  %s0 = inlined_call_operand.vmem [shape: bf16[16,16], index: 0, kind: input, shape index: {}]
  %s1 = inlined_call_operand.vmem [shape: bf16[2,16], index: 1, kind: input, shape index: {}]
  %s2 = inlined_call_operand.vmem [shape: bf16[16,8], index: 2, kind: input, shape index: {}]
  %s3 = inlined_call_operand.vmem [shape: bf16[8,32], index: 3, kind: input, shape index: {}]
  %s4 = inlined_call_operand.vmem [shape: f32[1,32], index: 4, kind: input, shape index: {}]
  %s5 = inlined_call_operand.vmem [shape: bf16[32,32], index: 5, kind: input, shape index: {}]
  %s6 = inlined_call_operand.vmem [shape: f32[1,32], index: 6, kind: input, shape index: {}]
  %s7 = inlined_call_operand.vmem [shape: f32[1,32], index: 7, kind: input, shape index: {}]
  %s8 = inlined_call_operand.vmem [shape: f32[1,32], index: 8, kind: input, shape index: {}]
  %s9 = inlined_call_operand.vmem [shape: bf16[32,32], index: 9, kind: input, shape index: {}]
  %s10 = inlined_call_operand.vmem [shape: f32[1,32], index: 10, kind: input, shape index: {}]
  %s11 = inlined_call_operand.vmem [shape: bf16[32,32], index: 11, kind: input, shape index: {}]
  %s12 = inlined_call_operand.vmem [shape: f32[1,32], index: 12, kind: input, shape index: {}]
  %s13 = inlined_call_operand.vmem [shape: f32[1,32], index: 13, kind: input, shape index: {}]
  %s14 = inlined_call_operand.vmem [shape: f32[1,32], index: 14, kind: input, shape index: {}]
  %s15 = inlined_call_operand.vmem [shape: bf16[32,32], index: 15, kind: input, shape index: {}]
  %s16 = inlined_call_operand.vmem [shape: f32[1,32], index: 16, kind: input, shape index: {}]
  %s17 = inlined_call_operand.vmem [shape: bf16[32,32], index: 17, kind: input, shape index: {}]
  %s18 = inlined_call_operand.vmem [shape: f32[1,32], index: 18, kind: input, shape index: {}]
  %s19 = inlined_call_operand.vmem [shape: f32[1,32], index: 19, kind: input, shape index: {}]
  %s20 = inlined_call_operand.vmem [shape: f32[1,32], index: 20, kind: input, shape index: {}]
  %s21 = inlined_call_operand.hbm [shape: f32[2,96], index: 21, kind: output, shape index: {0}]
  %s22 = inlined_call_operand.hbm [shape: f32[16,96], index: 22, kind: output, shape index: {1}]
  %23 = xla_tuple %s21, %s22
  %s24 = sld [smem:[#allocation0]]
  $region102: #{gca_forward.1} parent=0
    _
  %s26 = ssub.s32 1, %s24
  %s27 = scalar_select 0, %s26, %s24
  $region1: #{gca_forward.1} parent=0
    #allocation2 [shape = 'u8[1024]{0}', space=vmem, size = 0x400, scoped, tag = 'output window, operand 0, single buffered']
    #allocation3 [shape = 's32[1]{0}', space=sflag, size = 0x4, scoped, tag = 'scoped memory for gca_forward.1']
    #allocation4 [shape = 'u8[8192]{0}', space=vmem, size = 0x2000, scoped, tag = 'output window, operand 1, single buffered']
    #allocation5 [shape = 's32[1]{0}', space=sflag, size = 0x4, scoped, tag = 'scoped memory for gca_forward.1']
    %28 = vsyncpa [#allocation3], 0
    %29 = vsyncpa [#allocation5], 0
    // Predicated region
    $region2: #{gca_forward.1} parent=1 // pred_check
      _
    $region3: #{gca_forward.1} parent=1 // pred_check_branch
      %31 = sbr.rel (0) target = $region5
    $region4: #{gca_forward.1} parent=1 // pred_region
      _
    $region5: #{gca_forward.1} parent=1 // pred_fallthru
      _
    // Predicated region
    $region6: #{gca_forward.1} parent=1 // pred_check
      _
    $region7: #{gca_forward.1} parent=1 // pred_check_branch
      %33 = sbr.rel (0) target = $region9
    $region8: #{gca_forward.1} parent=1 // pred_region
      _
    $region9: #{gca_forward.1} parent=1 // pred_fallthru
      _
    // Predicated region
    $region10: #{gca_forward.1} parent=1 // pred_check
      _
    $region11: #{gca_forward.1} parent=1 // pred_check_branch
      %35 = sbr.rel (0) target = $region13
    $region12: #{gca_forward.1} parent=1 // pred_region
      _
    $region13: #{gca_forward.1} parent=1 // pred_fallthru
      _
    // Predicated region
    $region14: #{gca_forward.1} parent=1 // pred_check
      _
    $region15: #{gca_forward.1} parent=1 // pred_check_branch
      %37 = sbr.rel (0) target = $region17
    $region16: #{gca_forward.1} parent=1 // pred_region
      _
    $region17: #{gca_forward.1} parent=1 // pred_fallthru
      _
    // Predicated region
    $region18: #{gca_forward.1} parent=1 // pred_check
      _
    $region19: #{gca_forward.1} parent=1 // pred_check_branch
      %39 = sbr.rel (0) target = $region21
    $region20: #{gca_forward.1} parent=1 // pred_region
      _
    $region21: #{gca_forward.1} parent=1 // pred_fallthru
      _
    // Predicated region
    $region22: #{gca_forward.1} parent=1 // pred_check
      _
    $region23: #{gca_forward.1} parent=1 // pred_check_branch
      %41 = sbr.rel (0) target = $region25
    $region24: #{gca_forward.1} parent=1 // pred_region
      _
    $region25: #{gca_forward.1} parent=1 // pred_fallthru
      _
    // Predicated region
    $region26: #{gca_forward.1} parent=1 // pred_check
      _
    $region27: #{gca_forward.1} parent=1 // pred_check_branch
      %43 = sbr.rel (0) target = $region29
    $region28: #{gca_forward.1} parent=1 // pred_region
      _
    $region29: #{gca_forward.1} parent=1 // pred_fallthru
      _
    // Predicated region
    $region30: #{gca_forward.1} parent=1 // pred_check
      _
    $region31: #{gca_forward.1} parent=1 // pred_check_branch
      %45 = sbr.rel (0) target = $region33
    $region32: #{gca_forward.1} parent=1 // pred_region
      _
    $region33: #{gca_forward.1} parent=1 // pred_fallthru
      _
    // Predicated region
    $region34: #{gca_forward.1} parent=1 // pred_check
      _
    $region35: #{gca_forward.1} parent=1 // pred_check_branch
      %47 = sbr.rel (0) target = $region37
    $region36: #{gca_forward.1} parent=1 // pred_region
      _
    $region37: #{gca_forward.1} parent=1 // pred_fallthru
      _
    // Predicated region
    $region38: #{gca_forward.1} parent=1 // pred_check
      _
    $region39: #{gca_forward.1} parent=1 // pred_check_branch
      %49 = sbr.rel (0) target = $region41
    $region40: #{gca_forward.1} parent=1 // pred_region
      _
    $region41: #{gca_forward.1} parent=1 // pred_fallthru
      _
    // Predicated region
    $region42: #{gca_forward.1} parent=1 // pred_check
      _
    $region43: #{gca_forward.1} parent=1 // pred_check_branch
      %51 = sbr.rel (0) target = $region45
    $region44: #{gca_forward.1} parent=1 // pred_region
      _
    $region45: #{gca_forward.1} parent=1 // pred_fallthru
      _
    // Predicated region
    $region46: #{gca_forward.1} parent=1 // pred_check
      _
    $region47: #{gca_forward.1} parent=1 // pred_check_branch
      %53 = sbr.rel (0) target = $region49
    $region48: #{gca_forward.1} parent=1 // pred_region
      _
    $region49: #{gca_forward.1} parent=1 // pred_fallthru
      _
    // Predicated region
    $region50: #{gca_forward.1} parent=1 // pred_check
      _
    $region51: #{gca_forward.1} parent=1 // pred_check_branch
      %55 = sbr.rel (0) target = $region53
    $region52: #{gca_forward.1} parent=1 // pred_region
      _
    $region53: #{gca_forward.1} parent=1 // pred_fallthru
      _
    // Predicated region
    $region54: #{gca_forward.1} parent=1 // pred_check
      _
    $region55: #{gca_forward.1} parent=1 // pred_check_branch
      %57 = sbr.rel (0) target = $region57
    $region56: #{gca_forward.1} parent=1 // pred_region
      _
    $region57: #{gca_forward.1} parent=1 // pred_fallthru
      _
    // Predicated region
    $region58: #{gca_forward.1} parent=1 // pred_check
      _
    $region59: #{gca_forward.1} parent=1 // pred_check_branch
      %59 = sbr.rel (0) target = $region61
    $region60: #{gca_forward.1} parent=1 // pred_region
      _
    $region61: #{gca_forward.1} parent=1 // pred_fallthru
      _
    // Predicated region
    $region62: #{gca_forward.1} parent=1 // pred_check
      _
    $region63: #{gca_forward.1} parent=1 // pred_check_branch
      %61 = sbr.rel (0) target = $region65
    $region64: #{gca_forward.1} parent=1 // pred_region
      _
    $region65: #{gca_forward.1} parent=1 // pred_fallthru
      _
    // Predicated region
    $region66: #{gca_forward.1} parent=1 // pred_check
      _
    $region67: #{gca_forward.1} parent=1 // pred_check_branch
      %63 = sbr.rel (0) target = $region69
    $region68: #{gca_forward.1} parent=1 // pred_region
      _
    $region69: #{gca_forward.1} parent=1 // pred_fallthru
      _
    // Predicated region
    $region70: #{gca_forward.1} parent=1 // pred_check
      _
    $region71: #{gca_forward.1} parent=1 // pred_check_branch
      %65 = sbr.rel (0) target = $region73
    $region72: #{gca_forward.1} parent=1 // pred_region
      _
    $region73: #{gca_forward.1} parent=1 // pred_fallthru
      _
    // Predicated region
    $region74: #{gca_forward.1} parent=1 // pred_check
      _
    $region75: #{gca_forward.1} parent=1 // pred_check_branch
      %67 = sbr.rel (0) target = $region77
    $region76: #{gca_forward.1} parent=1 // pred_region
      _
    $region77: #{gca_forward.1} parent=1 // pred_fallthru
      _
    // Predicated region
    $region78: #{gca_forward.1} parent=1 // pred_check
      _
    $region79: #{gca_forward.1} parent=1 // pred_check_branch
      %69 = sbr.rel (0) target = $region81
    $region80: #{gca_forward.1} parent=1 // pred_region
      _
    $region81: #{gca_forward.1} parent=1 // pred_fallthru
      _
    // Predicated region
    $region82: #{gca_forward.1} parent=1 // pred_check
      _
    $region83: #{gca_forward.1} parent=1 // pred_check_branch
      %71 = sbr.rel (0) target = $region85
    $region84: #{gca_forward.1} parent=1 // pred_region
      _
    $region85: #{gca_forward.1} parent=1 // pred_fallthru
      _
    %v73 = vld [vmem:[%s0] sm:$0xf]
    %v74 = vld [vmem:[%s0 + $0x4] sm:$0xf]
    %v75 = vld [vmem:[%s1] sm:$0x1]
    %v76 = vld [vmem:[%s2] sm:$0xf]
    %v77 = vld [vmem:[%s2 + $0x4] sm:$0xf]
    %v80 = vunpack.c.l.b16 %v73
    %v81 = vunpack.c.l.b16 %v74
    %v82 = vpack.c.b16 %v81, %v80
    %v85 = vunpack.c.l.b16 %v76
    %v86 = vunpack.c.l.b16 %v77
    %v87 = vpack.c.b16 %v86, %v85
    %vm89 = vcmask 130048
    %v91 = vsel %vm89, %v82, 0
    %93 = vmatprep.subr.bf16.mxu0 0
    %94 = vmatpush1.bf16.msra.mxu0 %v87
    %95 = vmatprep.subr.bf16.mxu0 0
    %96 = vmatpush1.bf16.msra.mxu0 0
    %97 = vmatprep.subr.bf16.mxu0 0
    %98 = vmatpush1.bf16.msra.mxu0 0
    %99 = vmatprep.subr.bf16.mxu0 0
    %100 = vmatpush1.bf16.msra.mxu0 0
    %101 = vmatprep.subr.bf16.mxu0 0
    %102 = vmatpush1.bf16.msra.mxu0 0
    %103 = vmatprep.subr.bf16.mxu0 0
    %104 = vmatpush1.bf16.msra.mxu0 0
    %105 = vmatprep.subr.bf16.mxu0 0
    %106 = vmatpush1.bf16.msra.mxu0 0
    %107 = vmatprep.subr.bf16.mxu0 0
    %108 = vmatpush1.bf16.msra.mxu0 0
    %109 = vmatprep.subr.bf16.mxu0 0
    %110 = vmatpush1.bf16.msra.mxu0 0
    %111 = vmatprep.subr.bf16.mxu0 0
    %112 = vmatpush1.bf16.msra.mxu0 0
    %113 = vmatprep.subr.bf16.mxu0 0
    %114 = vmatpush1.bf16.msra.mxu0 0
    %115 = vmatprep.subr.bf16.mxu0 0
    %116 = vmatpush1.bf16.msra.mxu0 0
    %117 = vmatprep.subr.bf16.mxu0 0
    %118 = vmatpush1.bf16.msra.mxu0 0
    %119 = vmatprep.subr.bf16.mxu0 0
    %120 = vmatpush1.bf16.msra.mxu0 0
    %121 = vmatprep.subr.bf16.mxu0 0
    %122 = vmatpush1.bf16.msra.mxu0 0
    %123 = vmatprep.subr.bf16.mxu0 0
    %124 = vmatpush1.bf16.msra.mxu0 0
    %125 = vmatprep.mubr.bf16.mxu0 0
    %126 = vmatmul.mubr.bf16.gmra.mrb[0].mxu0 %v91
    %v127 = vpop.f32.mrb[0].mxu0
    %v128 = vadd.f32 0.0, %v127
    %v129 = vpop.f32.mrb[0].mxu0
    %v130 = vpop.f32.mrb[0].mxu0
    %v131 = vadd.f32 0.0, %v130
    %v132 = vpop.f32.mrb[0].mxu0
    %133 = vdwg.mxu0
    %v134 = vpack.c.bf16 %v131, %v128
    %v135 = vld [vmem:[%s3] sm:$0xf]
    %v136 = vld [vmem:[%s4] sm:$0x1]
    %v138 = vlaneseq
    %v139 = vshrl.u32 %v138, 7
    %v140 = vsub.s32 0, %v139
    %v141 = vrot.slane %v136, %v140
    %vm143 = vcmask 64512
    %v145 = vsel %vm143, %v134, 0
    %vm147 = vcmask 1043456
    %v149 = vsel %vm147, %v135, 0
    %151 = vmatprep.subr.bf16.mxu0 0
    %152 = vmatpush1.bf16.msra.mxu0 %v149
    %153 = vmatprep.subr.bf16.mxu0 0
    %154 = vmatpush1.bf16.msra.mxu0 0
    %155 = vmatprep.subr.bf16.mxu0 0
    %156 = vmatpush1.bf16.msra.mxu0 0
    %157 = vmatprep.subr.bf16.mxu0 0
    %158 = vmatpush1.bf16.msra.mxu0 0
    %159 = vmatprep.subr.bf16.mxu0 0
    %160 = vmatpush1.bf16.msra.mxu0 0
    %161 = vmatprep.subr.bf16.mxu0 0
    %162 = vmatpush1.bf16.msra.mxu0 0
    %163 = vmatprep.subr.bf16.mxu0 0
    %164 = vmatpush1.bf16.msra.mxu0 0
    %165 = vmatprep.subr.bf16.mxu0 0
    %166 = vmatpush1.bf16.msra.mxu0 0
    %167 = vmatprep.subr.bf16.mxu0 0
    %168 = vmatpush1.bf16.msra.mxu0 0
    %169 = vmatprep.subr.bf16.mxu0 0
    %170 = vmatpush1.bf16.msra.mxu0 0
    %171 = vmatprep.subr.bf16.mxu0 0
    %172 = vmatpush1.bf16.msra.mxu0 0
    %173 = vmatprep.subr.bf16.mxu0 0
    %174 = vmatpush1.bf16.msra.mxu0 0
    %175 = vmatprep.subr.bf16.mxu0 0
    %176 = vmatpush1.bf16.msra.mxu0 0
    %177 = vmatprep.subr.bf16.mxu0 0
    %178 = vmatpush1.bf16.msra.mxu0 0
    %179 = vmatprep.subr.bf16.mxu0 0
    %180 = vmatpush1.bf16.msra.mxu0 0
    %181 = vmatprep.subr.bf16.mxu0 0
    %182 = vmatpush1.bf16.msra.mxu0 0
    %183 = vmatprep.mubr.bf16.mxu0 0
    %184 = vmatmul.mubr.bf16.gmra.mrb[0].mxu0 %v145
    %v185 = vpop.f32.mrb[0].mxu0
    %v186 = vadd.f32 %v141, %v185
    %v187 = vpop.f32.mrb[0].mxu0
    %v188 = vpop.f32.mrb[0].mxu0
    %v189 = vadd.f32 %v141, %v188
    %v190 = vpop.f32.mrb[0].mxu0
    %191 = vdwg.mxu0
    %v192 = vmax.f32 %v186, 0.0
    %v193 = vmax.f32 %v189, 0.0
    %v194 = vpack.c.bf16 %v193, %v192
    %v195 = vld [vmem:[%s5] sm:$0xf]
    %v196 = vld [vmem:[%s5 + $0x4] sm:$0xf]
    %v197 = vld [vmem:[%s5 + $0x8] sm:$0xf]
    %v198 = vld [vmem:[%s5 + $0xc] sm:$0xf]
    %v199 = vld [vmem:[%s6] sm:$0x1]
    %v201 = vlaneseq
    %v202 = vshrl.u32 %v201, 7
    %v203 = vsub.s32 0, %v202
    %v204 = vrot.slane %v199, %v203
    %v210 = vunpack.c.l.b16 %v195
    %v211 = vunpack.c.l.b16 %v196
    %v212 = vunpack.c.l.b16 %v197
    %v213 = vunpack.c.l.b16 %v198
    %v214 = vpack.c.b16 %v211, %v210
    %v215 = vpack.c.b16 %v213, %v212
    %vm218 = vcmask 261120
    %v220 = vsel %vm218, %v194, 0
    %222 = vmatprep.subr.bf16.mxu0 0
    %223 = vmatpush1.bf16.msra.mxu0 %v214
    %224 = vmatprep.subr.bf16.mxu0 0
    %225 = vmatpush1.bf16.msra.mxu0 %v215
    %226 = vmatprep.subr.bf16.mxu0 0
    %227 = vmatpush1.bf16.msra.mxu0 0
    %228 = vmatprep.subr.bf16.mxu0 0
    %229 = vmatpush1.bf16.msra.mxu0 0
    %230 = vmatprep.subr.bf16.mxu0 0
    %231 = vmatpush1.bf16.msra.mxu0 0
    %232 = vmatprep.subr.bf16.mxu0 0
    %233 = vmatpush1.bf16.msra.mxu0 0
    %234 = vmatprep.subr.bf16.mxu0 0
    %235 = vmatpush1.bf16.msra.mxu0 0
    %236 = vmatprep.subr.bf16.mxu0 0
    %237 = vmatpush1.bf16.msra.mxu0 0
    %238 = vmatprep.subr.bf16.mxu0 0
    %239 = vmatpush1.bf16.msra.mxu0 0
    %240 = vmatprep.subr.bf16.mxu0 0
    %241 = vmatpush1.bf16.msra.mxu0 0
    %242 = vmatprep.subr.bf16.mxu0 0
    %243 = vmatpush1.bf16.msra.mxu0 0
    %244 = vmatprep.subr.bf16.mxu0 0
    %245 = vmatpush1.bf16.msra.mxu0 0
    %246 = vmatprep.subr.bf16.mxu0 0
    %247 = vmatpush1.bf16.msra.mxu0 0
    %248 = vmatprep.subr.bf16.mxu0 0
    %249 = vmatpush1.bf16.msra.mxu0 0
    %250 = vmatprep.subr.bf16.mxu0 0
    %251 = vmatpush1.bf16.msra.mxu0 0
    %252 = vmatprep.subr.bf16.mxu0 0
    %253 = vmatpush1.bf16.msra.mxu0 0
    %254 = vmatprep.mubr.bf16.mxu0 0
    %255 = vmatmul.mubr.bf16.gmra.mrb[0].mxu0 %v220
    %v256 = vpop.f32.mrb[0].mxu0
    %v257 = vadd.f32 %v204, %v256
    %v258 = vpop.f32.mrb[0].mxu0
    %v259 = vpop.f32.mrb[0].mxu0
    %v260 = vadd.f32 %v204, %v259
    %v261 = vpop.f32.mrb[0].mxu0
    %262 = vdwg.mxu0
    %v263 = vmax.f32 %v257, 0.0
    %v264 = vmax.f32 %v260, 0.0
    %v265 = vsel %vm218, %v263, 0.0
    %v266 = vsel %vm218, %v264, 0.0
    %v267 = vadd.f32 %v265, %v266
    %v268 = vrot.slane %v267, 4
    %v269 = vadd.f32 %v267, %v268
    %v270 = vrot.slane %v269, 2
    %v271 = vadd.f32 %v269, %v270
    %v272 = vrot.slane %v271, 1
    %v273 = vadd.f32 %v271, %v272
    %v274 = vmul.f32 %v263, %v263
    %v275 = vmul.f32 %v264, %v264
    %v276 = vsel %vm218, %v274, 0.0
    %v277 = vsel %vm218, %v275, 0.0
    %v278 = vadd.f32 %v276, %v277
    %v279 = vrot.slane %v278, 4
    %v280 = vadd.f32 %v278, %v279
    %v281 = vrot.slane %v280, 2
    %v282 = vadd.f32 %v280, %v281
    %v283 = vrot.slane %v282, 1
    %v284 = vadd.f32 %v282, %v283
    %v285 = vmul.f32 %v273, 0.0625
    %v286 = vmul.f32 %v284, 0.0625
    %v287 = vmul.f32 %v285, %v285
    %v288 = vsub.f32 %v286, %v287
    %v289 = vmax.f32 %v288, 0.0
    %v290 = vld [vmem:[%s7] sm:$0x1]
    %v291 = vadd.f32 %v289, 1e-05
    %v292 = vrsqrt.pop %v291
    %v293 = vmul.f32 %v290, %v292
    %v294 = vld [vmem:[%s8] sm:$0x1]
    %v295 = vmul.f32 %v285, %v293
    %v296 = vsub.f32 %v294, %v295
    %v298 = vlaneseq
    %v299 = vshrl.u32 %v298, 7
    %v300 = vsub.s32 0, %v299
    %v301 = vrot.slane %v293, %v300
    %v303 = vmul.f32 %v263, %v301
    %v304 = vmul.f32 %v264, %v301
    %v306 = vlaneseq
    %v307 = vshrl.u32 %v306, 7
    %v308 = vsub.s32 0, %v307
    %v309 = vrot.slane %v296, %v308
    %v311 = vadd.f32 %v303, %v309
    %v312 = vadd.f32 %v304, %v309
    %313 = vst.msk [vmem:[#allocation4] sm:$0xff] %vm218, %v311
    %314 = vst.msk [vmem:[#allocation4 + $0x8] sm:$0xff] %vm218, %v312
    %v315 = vpack.c.bf16 %v312, %v311
    %316 = vmatprep.subr.bf16.mxu0 0
    %317 = vmatpush1.bf16.msra.mxu0 %v315
    %318 = vmatprep.subr.bf16.mxu0 0
    %319 = vmatpush1.bf16.msra.mxu0 0
    %320 = vmatprep.subr.bf16.mxu0 0
    %321 = vmatpush1.bf16.msra.mxu0 0
    %322 = vmatprep.subr.bf16.mxu0 0
    %323 = vmatpush1.bf16.msra.mxu0 0
    %324 = vmatprep.subr.bf16.mxu0 0
    %325 = vmatpush1.bf16.msra.mxu0 0
    %326 = vmatprep.subr.bf16.mxu0 0
    %327 = vmatpush1.bf16.msra.mxu0 0
    %328 = vmatprep.subr.bf16.mxu0 0
    %329 = vmatpush1.bf16.msra.mxu0 0
    %330 = vmatprep.subr.bf16.mxu0 0
    %331 = vmatpush1.bf16.msra.mxu0 0
    %332 = vmatprep.subr.bf16.mxu0 0
    %333 = vmatpush1.bf16.msra.mxu0 0
    %334 = vmatprep.subr.bf16.mxu0 0
    %335 = vmatpush1.bf16.msra.mxu0 0
    %336 = vmatprep.subr.bf16.mxu0 0
    %337 = vmatpush1.bf16.msra.mxu0 0
    %338 = vmatprep.subr.bf16.mxu0 0
    %339 = vmatpush1.bf16.msra.mxu0 0
    %340 = vmatprep.subr.bf16.mxu0 0
    %341 = vmatpush1.bf16.msra.mxu0 0
    %342 = vmatprep.subr.bf16.mxu0 0
    %343 = vmatpush1.bf16.msra.mxu0 0
    %344 = vmatprep.subr.bf16.mxu0 0
    %345 = vmatpush1.bf16.msra.mxu0 0
    %346 = vmatprep.subr.bf16.mxu0 0
    %347 = vmatpush1.bf16.msra.mxu0 0
    %348 = vmatprep.mubr.bf16.mxu0 0
    %349 = vmatmul.mubr.bf16.gmra.mrb[0].mxu0 %v91
    %v350 = vpop.f32.mrb[0].mxu0
    %v351 = vadd.f32 0.0, %v350
    %v352 = vpop.f32.mrb[0].mxu0
    %v353 = vpop.f32.mrb[0].mxu0
    %v354 = vadd.f32 0.0, %v353
    %v355 = vpop.f32.mrb[0].mxu0
    %356 = vdwg.mxu0
    %v357 = vpack.c.bf16 %v354, %v351
    %v358 = vld [vmem:[%s9] sm:$0xf]
    %v359 = vld [vmem:[%s9 + $0x4] sm:$0xf]
    %v360 = vld [vmem:[%s9 + $0x8] sm:$0xf]
    %v361 = vld [vmem:[%s9 + $0xc] sm:$0xf]
    %v362 = vld [vmem:[%s10] sm:$0x1]
    %v364 = vlaneseq
    %v365 = vshrl.u32 %v364, 7
    %v366 = vsub.s32 0, %v365
    %v367 = vrot.slane %v362, %v366
    %v373 = vunpack.c.l.b16 %v358
    %v374 = vunpack.c.l.b16 %v359
    %v375 = vunpack.c.l.b16 %v360
    %v376 = vunpack.c.l.b16 %v361
    %v377 = vpack.c.b16 %v374, %v373
    %v378 = vpack.c.b16 %v376, %v375
    %v382 = vsel %vm218, %v357, 0
    %384 = vmatprep.subr.bf16.mxu0 0
    %385 = vmatpush1.bf16.msra.mxu0 %v377
    %386 = vmatprep.subr.bf16.mxu0 0
    %387 = vmatpush1.bf16.msra.mxu0 %v378
    %388 = vmatprep.subr.bf16.mxu0 0
    %389 = vmatpush1.bf16.msra.mxu0 0
    %390 = vmatprep.subr.bf16.mxu0 0
    %391 = vmatpush1.bf16.msra.mxu0 0
    %392 = vmatprep.subr.bf16.mxu0 0
    %393 = vmatpush1.bf16.msra.mxu0 0
    %394 = vmatprep.subr.bf16.mxu0 0
    %395 = vmatpush1.bf16.msra.mxu0 0
    %396 = vmatprep.subr.bf16.mxu0 0
    %397 = vmatpush1.bf16.msra.mxu0 0
    %398 = vmatprep.subr.bf16.mxu0 0
    %399 = vmatpush1.bf16.msra.mxu0 0
    %400 = vmatprep.subr.bf16.mxu0 0
    %401 = vmatpush1.bf16.msra.mxu0 0
    %402 = vmatprep.subr.bf16.mxu0 0
    %403 = vmatpush1.bf16.msra.mxu0 0
    %404 = vmatprep.subr.bf16.mxu0 0
    %405 = vmatpush1.bf16.msra.mxu0 0
    %406 = vmatprep.subr.bf16.mxu0 0
    %407 = vmatpush1.bf16.msra.mxu0 0
    %408 = vmatprep.subr.bf16.mxu0 0
    %409 = vmatpush1.bf16.msra.mxu0 0
    %410 = vmatprep.subr.bf16.mxu0 0
    %411 = vmatpush1.bf16.msra.mxu0 0
    %412 = vmatprep.subr.bf16.mxu0 0
    %413 = vmatpush1.bf16.msra.mxu0 0
    %414 = vmatprep.subr.bf16.mxu0 0
    %415 = vmatpush1.bf16.msra.mxu0 0
    %416 = vmatprep.mubr.bf16.mxu0 0
    %417 = vmatmul.mubr.bf16.gmra.mrb[0].mxu0 %v382
    %v418 = vpop.f32.mrb[0].mxu0
    %v419 = vadd.f32 %v367, %v418
    %v420 = vpop.f32.mrb[0].mxu0
    %v421 = vpop.f32.mrb[0].mxu0
    %v422 = vadd.f32 %v367, %v421
    %v423 = vpop.f32.mrb[0].mxu0
    %424 = vdwg.mxu0
    %v425 = vmax.f32 %v419, 0.0
    %v426 = vmax.f32 %v422, 0.0
    %v427 = vpack.c.bf16 %v426, %v425
    %v428 = vld [vmem:[%s11] sm:$0xf]
    %v429 = vld [vmem:[%s11 + $0x4] sm:$0xf]
    %v430 = vld [vmem:[%s11 + $0x8] sm:$0xf]
    %v431 = vld [vmem:[%s11 + $0xc] sm:$0xf]
    %v432 = vld [vmem:[%s12] sm:$0x1]
    %v434 = vlaneseq
    %v435 = vshrl.u32 %v434, 7
    %v436 = vsub.s32 0, %v435
    %v437 = vrot.slane %v432, %v436
    %v443 = vunpack.c.l.b16 %v428
    %v444 = vunpack.c.l.b16 %v429
    %v445 = vunpack.c.l.b16 %v430
    %v446 = vunpack.c.l.b16 %v431
    %v447 = vpack.c.b16 %v444, %v443
    %v448 = vpack.c.b16 %v446, %v445
    %v452 = vsel %vm218, %v427, 0
    %454 = vmatprep.subr.bf16.mxu0 0
    %455 = vmatpush1.bf16.msra.mxu0 %v447
    %456 = vmatprep.subr.bf16.mxu0 0
    %457 = vmatpush1.bf16.msra.mxu0 %v448
    %458 = vmatprep.subr.bf16.mxu0 0
    %459 = vmatpush1.bf16.msra.mxu0 0
    %460 = vmatprep.subr.bf16.mxu0 0
    %461 = vmatpush1.bf16.msra.mxu0 0
    %462 = vmatprep.subr.bf16.mxu0 0
    %463 = vmatpush1.bf16.msra.mxu0 0
    %464 = vmatprep.subr.bf16.mxu0 0
    %465 = vmatpush1.bf16.msra.mxu0 0
    %466 = vmatprep.subr.bf16.mxu0 0
    %467 = vmatpush1.bf16.msra.mxu0 0
    %468 = vmatprep.subr.bf16.mxu0 0
    %469 = vmatpush1.bf16.msra.mxu0 0
    %470 = vmatprep.subr.bf16.mxu0 0
    %471 = vmatpush1.bf16.msra.mxu0 0
    %472 = vmatprep.subr.bf16.mxu0 0
    %473 = vmatpush1.bf16.msra.mxu0 0
    %474 = vmatprep.subr.bf16.mxu0 0
    %475 = vmatpush1.bf16.msra.mxu0 0
    %476 = vmatprep.subr.bf16.mxu0 0
    %477 = vmatpush1.bf16.msra.mxu0 0
    %478 = vmatprep.subr.bf16.mxu0 0
    %479 = vmatpush1.bf16.msra.mxu0 0
    %480 = vmatprep.subr.bf16.mxu0 0
    %481 = vmatpush1.bf16.msra.mxu0 0
    %482 = vmatprep.subr.bf16.mxu0 0
    %483 = vmatpush1.bf16.msra.mxu0 0
    %484 = vmatprep.subr.bf16.mxu0 0
    %485 = vmatpush1.bf16.msra.mxu0 0
    %486 = vmatprep.mubr.bf16.mxu0 0
    %487 = vmatmul.mubr.bf16.gmra.mrb[0].mxu0 %v452
    %v488 = vpop.f32.mrb[0].mxu0
    %v489 = vadd.f32 %v437, %v488
    %v490 = vpop.f32.mrb[0].mxu0
    %v491 = vpop.f32.mrb[0].mxu0
    %v492 = vadd.f32 %v437, %v491
    %v493 = vpop.f32.mrb[0].mxu0
    %494 = vdwg.mxu0
    %v495 = vmax.f32 %v489, 0.0
    %v496 = vmax.f32 %v492, 0.0
    %v497 = vsel %vm218, %v495, 0.0
    %v498 = vsel %vm218, %v496, 0.0
    %v499 = vadd.f32 %v497, %v498
    %v500 = vrot.slane %v499, 4
    %v501 = vadd.f32 %v499, %v500
    %v502 = vrot.slane %v501, 2
    %v503 = vadd.f32 %v501, %v502
    %v504 = vrot.slane %v503, 1
    %v505 = vadd.f32 %v503, %v504
    %v506 = vmul.f32 %v495, %v495
    %v507 = vmul.f32 %v496, %v496
    %v508 = vsel %vm218, %v506, 0.0
    %v509 = vsel %vm218, %v507, 0.0
    %v510 = vadd.f32 %v508, %v509
    %v511 = vrot.slane %v510, 4
    %v512 = vadd.f32 %v510, %v511
    %v513 = vrot.slane %v512, 2
    %v514 = vadd.f32 %v512, %v513
    %v515 = vrot.slane %v514, 1
    %v516 = vadd.f32 %v514, %v515
    %v517 = vmul.f32 %v505, 0.0625
    %v518 = vmul.f32 %v516, 0.0625
    %v519 = vmul.f32 %v517, %v517
    %v520 = vsub.f32 %v518, %v519
    %v521 = vmax.f32 %v520, 0.0
    %v522 = vld [vmem:[%s13] sm:$0x1]
    %v523 = vadd.f32 %v521, 1e-05
    %v524 = vrsqrt.pop %v523
    %v525 = vmul.f32 %v522, %v524
    %v526 = vld [vmem:[%s14] sm:$0x1]
    %v527 = vmul.f32 %v517, %v525
    %v528 = vsub.f32 %v526, %v527
    %v530 = vlaneseq
    %v531 = vshrl.u32 %v530, 7
    %v532 = vsub.s32 0, %v531
    %v533 = vrot.slane %v525, %v532
    %v535 = vmul.f32 %v495, %v533
    %v536 = vmul.f32 %v496, %v533
    %v538 = vlaneseq
    %v539 = vshrl.u32 %v538, 7
    %v540 = vsub.s32 0, %v539
    %v541 = vrot.slane %v528, %v540
    %v543 = vadd.f32 %v535, %v541
    %v544 = vadd.f32 %v536, %v541
    %547 = vrot.lane.b32.xlu0 %v543, 32
    %v548 = vpop.permute.xlu0 %547
    %549 = vrot.lane.b32.xlu0 %v544, 32
    %v550 = vpop.permute.xlu0 %549
    %vm553 = vcmask 523520
    %554 = vst.msk [vmem:[#allocation4] sm:$0xff] %vm553, %v548
    %555 = vst.msk [vmem:[#allocation4 + $0x8] sm:$0xff] %vm553, %v550
    %v556 = vpack.c.bf16 %v544, %v543
    %557 = vmatprep.subr.bf16.mxu0 0
    %558 = vmatpush1.bf16.msra.mxu0 %v556
    %559 = vmatprep.subr.bf16.mxu0 0
    %560 = vmatpush1.bf16.msra.mxu0 0
    %561 = vmatprep.subr.bf16.mxu0 0
    %562 = vmatpush1.bf16.msra.mxu0 0
    %563 = vmatprep.subr.bf16.mxu0 0
    %564 = vmatpush1.bf16.msra.mxu0 0
    %565 = vmatprep.subr.bf16.mxu0 0
    %566 = vmatpush1.bf16.msra.mxu0 0
    %567 = vmatprep.subr.bf16.mxu0 0
    %568 = vmatpush1.bf16.msra.mxu0 0
    %569 = vmatprep.subr.bf16.mxu0 0
    %570 = vmatpush1.bf16.msra.mxu0 0
    %571 = vmatprep.subr.bf16.mxu0 0
    %572 = vmatpush1.bf16.msra.mxu0 0
    %573 = vmatprep.subr.bf16.mxu0 0
    %574 = vmatpush1.bf16.msra.mxu0 0
    %575 = vmatprep.subr.bf16.mxu0 0
    %576 = vmatpush1.bf16.msra.mxu0 0
    %577 = vmatprep.subr.bf16.mxu0 0
    %578 = vmatpush1.bf16.msra.mxu0 0
    %579 = vmatprep.subr.bf16.mxu0 0
    %580 = vmatpush1.bf16.msra.mxu0 0
    %581 = vmatprep.subr.bf16.mxu0 0
    %582 = vmatpush1.bf16.msra.mxu0 0
    %583 = vmatprep.subr.bf16.mxu0 0
    %584 = vmatpush1.bf16.msra.mxu0 0
    %585 = vmatprep.subr.bf16.mxu0 0
    %586 = vmatpush1.bf16.msra.mxu0 0
    %587 = vmatprep.subr.bf16.mxu0 0
    %588 = vmatpush1.bf16.msra.mxu0 0
    %589 = vmatprep.mubr.bf16.mxu0 0
    %590 = vmatmul.mubr.bf16.gmra.mrb[0].mxu0 %v91
    %v591 = vpop.f32.mrb[0].mxu0
    %v592 = vadd.f32 0.0, %v591
    %v593 = vpop.f32.mrb[0].mxu0
    %v594 = vpop.f32.mrb[0].mxu0
    %v595 = vadd.f32 0.0, %v594
    %v596 = vpop.f32.mrb[0].mxu0
    %597 = vdwg.mxu0
    %v598 = vpack.c.bf16 %v595, %v592
    %v599 = vld [vmem:[%s15] sm:$0xf]
    %v600 = vld [vmem:[%s15 + $0x4] sm:$0xf]
    %v601 = vld [vmem:[%s15 + $0x8] sm:$0xf]
    %v602 = vld [vmem:[%s15 + $0xc] sm:$0xf]
    %v603 = vld [vmem:[%s16] sm:$0x1]
    %v605 = vlaneseq
    %v606 = vshrl.u32 %v605, 7
    %v607 = vsub.s32 0, %v606
    %v608 = vrot.slane %v603, %v607
    %v614 = vunpack.c.l.b16 %v599
    %v615 = vunpack.c.l.b16 %v600
    %v616 = vunpack.c.l.b16 %v601
    %v617 = vunpack.c.l.b16 %v602
    %v618 = vpack.c.b16 %v615, %v614
    %v619 = vpack.c.b16 %v617, %v616
    %v623 = vsel %vm218, %v598, 0
    %625 = vmatprep.subr.bf16.mxu0 0
    %626 = vmatpush1.bf16.msra.mxu0 %v618
    %627 = vmatprep.subr.bf16.mxu0 0
    %628 = vmatpush1.bf16.msra.mxu0 %v619
    %629 = vmatprep.subr.bf16.mxu0 0
    %630 = vmatpush1.bf16.msra.mxu0 0
    %631 = vmatprep.subr.bf16.mxu0 0
    %632 = vmatpush1.bf16.msra.mxu0 0
    %633 = vmatprep.subr.bf16.mxu0 0
    %634 = vmatpush1.bf16.msra.mxu0 0
    %635 = vmatprep.subr.bf16.mxu0 0
    %636 = vmatpush1.bf16.msra.mxu0 0
    %637 = vmatprep.subr.bf16.mxu0 0
    %638 = vmatpush1.bf16.msra.mxu0 0
    %639 = vmatprep.subr.bf16.mxu0 0
    %640 = vmatpush1.bf16.msra.mxu0 0
    %641 = vmatprep.subr.bf16.mxu0 0
    %642 = vmatpush1.bf16.msra.mxu0 0
    %643 = vmatprep.subr.bf16.mxu0 0
    %644 = vmatpush1.bf16.msra.mxu0 0
    %645 = vmatprep.subr.bf16.mxu0 0
    %646 = vmatpush1.bf16.msra.mxu0 0
    %647 = vmatprep.subr.bf16.mxu0 0
    %648 = vmatpush1.bf16.msra.mxu0 0
    %649 = vmatprep.subr.bf16.mxu0 0
    %650 = vmatpush1.bf16.msra.mxu0 0
    %651 = vmatprep.subr.bf16.mxu0 0
    %652 = vmatpush1.bf16.msra.mxu0 0
    %653 = vmatprep.subr.bf16.mxu0 0
    %654 = vmatpush1.bf16.msra.mxu0 0
    %655 = vmatprep.subr.bf16.mxu0 0
    %656 = vmatpush1.bf16.msra.mxu0 0
    %657 = vmatprep.mubr.bf16.mxu0 0
    %658 = vmatmul.mubr.bf16.gmra.mrb[0].mxu0 %v623
    %v659 = vpop.f32.mrb[0].mxu0
    %v660 = vadd.f32 %v608, %v659
    %v661 = vpop.f32.mrb[0].mxu0
    %v662 = vpop.f32.mrb[0].mxu0
    %v663 = vadd.f32 %v608, %v662
    %v664 = vpop.f32.mrb[0].mxu0
    %665 = vdwg.mxu0
    %v666 = vmax.f32 %v660, 0.0
    %v667 = vmax.f32 %v663, 0.0
    %v668 = vpack.c.bf16 %v667, %v666
    %v669 = vld [vmem:[%s17] sm:$0xf]
    %v670 = vld [vmem:[%s17 + $0x4] sm:$0xf]
    %v671 = vld [vmem:[%s17 + $0x8] sm:$0xf]
    %v672 = vld [vmem:[%s17 + $0xc] sm:$0xf]
    %v673 = vld [vmem:[%s18] sm:$0x1]
    %v675 = vlaneseq
    %v676 = vshrl.u32 %v675, 7
    %v677 = vsub.s32 0, %v676
    %v678 = vrot.slane %v673, %v677
    %v684 = vunpack.c.l.b16 %v669
    %v685 = vunpack.c.l.b16 %v670
    %v686 = vunpack.c.l.b16 %v671
    %v687 = vunpack.c.l.b16 %v672
    %v688 = vpack.c.b16 %v685, %v684
    %v689 = vpack.c.b16 %v687, %v686
    %v693 = vsel %vm218, %v668, 0
    %695 = vmatprep.subr.bf16.mxu0 0
    %696 = vmatpush1.bf16.msra.mxu0 %v688
    %697 = vmatprep.subr.bf16.mxu0 0
    %698 = vmatpush1.bf16.msra.mxu0 %v689
    %699 = vmatprep.subr.bf16.mxu0 0
    %700 = vmatpush1.bf16.msra.mxu0 0
    %701 = vmatprep.subr.bf16.mxu0 0
    %702 = vmatpush1.bf16.msra.mxu0 0
    %703 = vmatprep.subr.bf16.mxu0 0
    %704 = vmatpush1.bf16.msra.mxu0 0
    %705 = vmatprep.subr.bf16.mxu0 0
    %706 = vmatpush1.bf16.msra.mxu0 0
    %707 = vmatprep.subr.bf16.mxu0 0
    %708 = vmatpush1.bf16.msra.mxu0 0
    %709 = vmatprep.subr.bf16.mxu0 0
    %710 = vmatpush1.bf16.msra.mxu0 0
    %711 = vmatprep.subr.bf16.mxu0 0
    %712 = vmatpush1.bf16.msra.mxu0 0
    %713 = vmatprep.subr.bf16.mxu0 0
    %714 = vmatpush1.bf16.msra.mxu0 0
    %715 = vmatprep.subr.bf16.mxu0 0
    %716 = vmatpush1.bf16.msra.mxu0 0
    %717 = vmatprep.subr.bf16.mxu0 0
    %718 = vmatpush1.bf16.msra.mxu0 0
    %719 = vmatprep.subr.bf16.mxu0 0
    %720 = vmatpush1.bf16.msra.mxu0 0
    %721 = vmatprep.subr.bf16.mxu0 0
    %722 = vmatpush1.bf16.msra.mxu0 0
    %723 = vmatprep.subr.bf16.mxu0 0
    %724 = vmatpush1.bf16.msra.mxu0 0
    %725 = vmatprep.subr.bf16.mxu0 0
    %726 = vmatpush1.bf16.msra.mxu0 0
    %727 = vmatprep.mubr.bf16.mxu0 0
    %728 = vmatmul.mubr.bf16.gmra.mrb[0].mxu0 %v693
    %v729 = vpop.f32.mrb[0].mxu0
    %v730 = vadd.f32 %v678, %v729
    %v731 = vpop.f32.mrb[0].mxu0
    %v732 = vpop.f32.mrb[0].mxu0
    %v733 = vadd.f32 %v678, %v732
    %v734 = vpop.f32.mrb[0].mxu0
    %735 = vdwg.mxu0
    %v736 = vmax.f32 %v730, 0.0
    %v737 = vmax.f32 %v733, 0.0
    %v738 = vsel %vm218, %v736, 0.0
    %v739 = vsel %vm218, %v737, 0.0
    %v740 = vadd.f32 %v738, %v739
    %v741 = vrot.slane %v740, 4
    %v742 = vadd.f32 %v740, %v741
    %v743 = vrot.slane %v742, 2
    %v744 = vadd.f32 %v742, %v743
    %v745 = vrot.slane %v744, 1
    %v746 = vadd.f32 %v744, %v745
    %v747 = vmul.f32 %v736, %v736
    %v748 = vmul.f32 %v737, %v737
    %v749 = vsel %vm218, %v747, 0.0
    %v750 = vsel %vm218, %v748, 0.0
    %v751 = vadd.f32 %v749, %v750
    %v752 = vrot.slane %v751, 4
    %v753 = vadd.f32 %v751, %v752
    %v754 = vrot.slane %v753, 2
    %v755 = vadd.f32 %v753, %v754
    %v756 = vrot.slane %v755, 1
    %v757 = vadd.f32 %v755, %v756
    %v758 = vmul.f32 %v746, 0.0625
    %v759 = vmul.f32 %v757, 0.0625
    %v760 = vmul.f32 %v758, %v758
    %v761 = vsub.f32 %v759, %v760
    %v762 = vmax.f32 %v761, 0.0
    %v763 = vld [vmem:[%s19] sm:$0x1]
    %v764 = vadd.f32 %v762, 1e-05
    %v765 = vrsqrt.pop %v764
    %v766 = vmul.f32 %v763, %v765
    %v767 = vld [vmem:[%s20] sm:$0x1]
    %v768 = vmul.f32 %v758, %v766
    %v769 = vsub.f32 %v767, %v768
    %v771 = vlaneseq
    %v772 = vshrl.u32 %v771, 7
    %v773 = vsub.s32 0, %v772
    %v774 = vrot.slane %v766, %v773
    %v776 = vmul.f32 %v736, %v774
    %v777 = vmul.f32 %v737, %v774
    %v779 = vlaneseq
    %v780 = vshrl.u32 %v779, 7
    %v781 = vsub.s32 0, %v780
    %v782 = vrot.slane %v769, %v781
    %v784 = vadd.f32 %v776, %v782
    %v785 = vadd.f32 %v777, %v782
    %788 = vrot.lane.b32.xlu0 %v784, 64
    %v789 = vpop.permute.xlu0 %788
    %790 = vrot.lane.b32.xlu0 %v785, 64
    %v791 = vpop.permute.xlu0 %790
    %vm794 = vcmask 785920
    %795 = vst.msk [vmem:[#allocation4] sm:$0xff] %vm794, %v789
    %796 = vst.msk [vmem:[#allocation4 + $0x8] sm:$0xff] %vm794, %v791
    %v797 = vld [vmem:[#allocation4] sm:$0xff]
    %v798 = vld [vmem:[#allocation4 + $0x8] sm:$0xff]
    %v799 = vpack.c.bf16 %v798, %v797
    %v801 = vsel %vm89, %v75, 0
    %803 = vmatprep.subr.bf16.mxu0 0
    %804 = vmatpush1.bf16.msra.mxu0 %v799
    %805 = vmatprep.subr.bf16.mxu0 0
    %806 = vmatpush1.bf16.msra.mxu0 0
    %807 = vmatprep.subr.bf16.mxu0 0
    %808 = vmatpush1.bf16.msra.mxu0 0
    %809 = vmatprep.subr.bf16.mxu0 0
    %810 = vmatpush1.bf16.msra.mxu0 0
    %811 = vmatprep.subr.bf16.mxu0 0
    %812 = vmatpush1.bf16.msra.mxu0 0
    %813 = vmatprep.subr.bf16.mxu0 0
    %814 = vmatpush1.bf16.msra.mxu0 0
    %815 = vmatprep.subr.bf16.mxu0 0
    %816 = vmatpush1.bf16.msra.mxu0 0
    %817 = vmatprep.subr.bf16.mxu0 0
    %818 = vmatpush1.bf16.msra.mxu0 0
    %819 = vmatprep.subr.bf16.mxu0 0
    %820 = vmatpush1.bf16.msra.mxu0 0
    %821 = vmatprep.subr.bf16.mxu0 0
    %822 = vmatpush1.bf16.msra.mxu0 0
    %823 = vmatprep.subr.bf16.mxu0 0
    %824 = vmatpush1.bf16.msra.mxu0 0
    %825 = vmatprep.subr.bf16.mxu0 0
    %826 = vmatpush1.bf16.msra.mxu0 0
    %827 = vmatprep.subr.bf16.mxu0 0
    %828 = vmatpush1.bf16.msra.mxu0 0
    %829 = vmatprep.subr.bf16.mxu0 0
    %830 = vmatpush1.bf16.msra.mxu0 0
    %831 = vmatprep.subr.bf16.mxu0 0
    %832 = vmatpush1.bf16.msra.mxu0 0
    %833 = vmatprep.subr.bf16.mxu0 0
    %834 = vmatpush1.bf16.msra.mxu0 0
    %835 = vmatprep.mubr.bf16.mxu0 0
    %836 = vmatmul.mubr.bf16.gmra.mrb[0].mxu0 %v801
    %v837 = vpop.f32.mrb[0].mxu0
    %v838 = vadd.f32 0.0, %v837
    %v839 = vpop.f32.mrb[0].mxu0
    %v840 = vpop.f32.mrb[0].mxu0
    %v841 = vpop.f32.mrb[0].mxu0
    %842 = vdwg.mxu0
    %vm843 = vcmask 779264
    %844 = vst.msk [vmem:[#allocation2] sm:$0x3] %vm843, %v838
    // Predicated region
    $region86: #{gca_forward.1} parent=1 // pred_check
      _
    $region87: #{gca_forward.1} parent=1 // pred_check_branch
      %846 = sbr.rel (0) target = $region89
    $region88: #{gca_forward.1} parent=1 // pred_region
      %s848 = ssub.s32 32, 32
      %849 = vsyncadd [#allocation3], %s848
      %s851 = sshll.u32 [#allocation2], 4
      %s852 = int_to_ptr.vmem [resolvable:$true] %s851
      %854 = dma.vmem_to_hbm [thread:$0]  %s852, 32, %s21, [#allocation3]
    $region89: #{gca_forward.1} parent=1 // pred_fallthru
      _
    // Predicated region
    $region90: #{gca_forward.1} parent=1 // pred_check
      _
    $region91: #{gca_forward.1} parent=1 // pred_check_branch
      %856 = sbr.rel (0) target = $region93
    $region92: #{gca_forward.1} parent=1 // pred_region
      %s858 = ssub.s32 256, 256
      %859 = vsyncadd [#allocation5], %s858
      %s860 = sshll.u32 [#allocation4], 4
      %s861 = int_to_ptr.vmem [resolvable:$true] %s860
      %866 = dma.vmem_to_hbm [thread:$0]  %s861, 256, %s22, [#allocation5], 128, 128, 8
    $region93: #{gca_forward.1} parent=1 // pred_fallthru
      _
    // Predicated region
    $region94: #{gca_forward.1} parent=1 // pred_check
      _
    $region95: #{gca_forward.1} parent=1 // pred_check_branch
      %868 = sbr.rel (0) target = $region97
    $region96: #{gca_forward.1} parent=1 // pred_region
      %869 = dma.done [#allocation3], 32
    $region97: #{gca_forward.1} parent=1 // pred_fallthru
      _
    // Predicated region
    $region98: #{gca_forward.1} parent=1 // pred_check
      _
    $region99: #{gca_forward.1} parent=1 // pred_check_branch
      %871 = sbr.rel (0) target = $region101
    $region100: #{gca_forward.1} parent=1 // pred_region
      %872 = dma.done [#allocation5], 256
    $region101: #{gca_forward.1} parent=1 // pred_fallthru
      _
    %873 = vsyncpa [#allocation3], 1
    %874 = vsyncpa [#allocation5], 1

</llo_original>
